<compile_context>
chip_gen: v5e
topology: v5e:2x2
jax: 0.10.0
libtpu: 0.0.40
codegen_flags: <defaults>
</compile_context>

<pallas_src>
import functools

import jax
import jax.numpy as jnp
from jax.experimental import pallas as pl
from jax.experimental.pallas import tpu as pltpu

_LANES = 128
_SUBLANES = 8


def _round_up(x, m):
    return ((x + m - 1) // m) * m


def _kd_loss_jnp(stu_outs, tea_outs, eps):
    """Fused-XLA reference / small-input fallback (exact module semantics)."""
    stu = jax.nn.sigmoid(stu_outs.astype(jnp.float32))
    tea = jax.nn.sigmoid(tea_outs.astype(jnp.float32))
    loss = -tea * jnp.log(stu + eps)
    return loss.sum(axis=-1).mean(axis=0)


def _kd_loss_kernel(stu_ref, tea_ref, out_ref, *, eps, n_valid, tile_rows,
                    tiles_per_core):
    c = pl.program_id(0)   # core slice ("parallel")
    i = pl.program_id(1)   # row tile within this core's slice ("arbitrary" reduction)

    @pl.when(i == 0)
    def _init():
        out_ref[...] = jnp.zeros_like(out_ref)

    # Upcast in-kernel (bf16 inputs travel at half the HBM bytes).
    stu = stu_ref[...].astype(jnp.float32)
    tea = tea_ref[...].astype(jnp.float32)

    # sigmoid(x) == 0.5 * (tanh(0.5 * x) + 1): one EUP op per operand instead of the
    # exp + reciprocal form (matters once the kernel becomes EUP-bound, e.g. v7x).
    s_sig = 0.5 * (jnp.tanh(0.5 * stu) + 1.0)
    t_sig = 0.5 * (jnp.tanh(0.5 * tea) + 1.0)
    loss = -t_sig * jnp.log(s_sig + eps)                      # [tile_rows, 128]

    # Mask everything outside the original B*C elements (lane-pad of the last row,
    # partial final tile, clamped junk tiles from the core split). Pure VPU work.
    base_row = (c * tiles_per_core + i) * tile_rows
    r = jax.lax.broadcasted_iota(jnp.int32, loss.shape, 0)
    l = jax.lax.broadcasted_iota(jnp.int32, loss.shape, 1)
    valid = (base_row + r) * _LANES + l < n_valid
    loss = jnp.where(valid, loss, 0.0)

    # Vector accumulate into the resident (8, 128) output block: one vreg add per
    # 8 rows, no per-step cross-lane reduce.
    out_ref[...] = out_ref[...] + jnp.sum(
        loss.reshape(-1, _SUBLANES, _LANES), axis=0)


def kd_loss(stu_outs: jax.Array, tea_outs: jax.Array, eps: float = 1e-6,
            row_tile: int = 2048, num_cores: int = 2,
            min_rows_for_pallas: int = 512) -> jax.Array:
    assert stu_outs.shape == tea_outs.shape and stu_outs.ndim == 2
    B, C = stu_outs.shape
    n = B * C
    rows = pl.cdiv(n, _LANES)

    # Tiny inputs: pallas_call + reshape overhead dominates; fused XLA is faster.
    if rows < min_rows_for_pallas:
        return _kd_loss_jnp(stu_outs, tea_outs, eps)

    # Lane-dense flatten. Reshape is layout-free; only pad (one extra copy) when
    # B*C is not a multiple of 128 — the kernel masks, so the pad value is irrelevant.
    pad = rows * _LANES - n
    if pad:
        stu2 = jnp.pad(stu_outs.reshape(-1), (0, pad)).reshape(rows, _LANES)
        tea2 = jnp.pad(tea_outs.reshape(-1), (0, pad)).reshape(rows, _LANES)
    else:
        stu2 = stu_outs.reshape(rows, _LANES)
        tea2 = tea_outs.reshape(rows, _LANES)

    # Sublane alignment: 16-bit dtypes pack 16 rows per vreg.
    sub = 16 if jnp.dtype(stu_outs.dtype).itemsize < 4 else _SUBLANES
    tr = min(_round_up(row_tile, sub), _round_up(rows, sub))

    total_tiles = pl.cdiv(rows, tr)
    nc = max(1, min(num_cores, total_tiles))          # leading "parallel" axis (v7x: 2 TCs)
    tiles_per_core = pl.cdiv(total_tiles, nc)
    max_block = total_tiles - 1

    def in_idx(c, i):
        # Clamp so the DMA start always stays in bounds; junk tiles (when total_tiles
        # doesn't split evenly) are zeroed by the in-kernel mask, which uses the
        # unclamped logical index.
        return (jnp.minimum(c * tiles_per_core + i, max_block), 0)

    def out_idx(c, i):
        return (c, 0, 0)

    kernel = functools.partial(
        _kd_loss_kernel, eps=eps, n_valid=n, tile_rows=tr,
        tiles_per_core=tiles_per_core)

    partials = pl.pallas_call(
        kernel,
        out_shape=jax.ShapeDtypeStruct((nc, _SUBLANES, _LANES), jnp.float32),
        grid=(nc, tiles_per_core),
        in_specs=[
            pl.BlockSpec((tr, _LANES), in_idx),
            pl.BlockSpec((tr, _LANES), in_idx),
        ],
        out_specs=pl.BlockSpec((None, _SUBLANES, _LANES), out_idx),
        compiler_params=pltpu.CompilerParams(
            dimension_semantics=("parallel", "arbitrary"),
            vmem_limit_bytes=32 * 1024 * 1024,
        ),
    )(stu2, tea2)

    # sum(dim=-1).mean(dim=0) over the original [B, C]  ==  total_sum / B.
    return jnp.sum(partials) / jnp.float32(B)


if __name__ == "__main__":
    key = jax.random.PRNGKey(0)
    k1, k2, k3, k4 = jax.random.split(key, 4)

    # Small shape consistent with the module (student / teacher logits).
    B, C = 8, 32
    stu = jax.random.normal(k1, (B, C), dtype=jnp.float32)
    tea = jax.random.normal(k2, (B, C), dtype=jnp.float32)

    # 1) Force the Pallas path even at this tiny size so the kernel itself runs.
    out = jax.block_until_ready(kd_loss(stu, tea, min_rows_for_pallas=0))
    ref = _kd_loss_jnp(stu, tea, 1e-6)
    assert jnp.allclose(out, ref, rtol=1e-5, atol=1e-5), (out, ref)

    # 2) Exercise tail padding, partial tiles, the 2-core split and junk-tile clamp:
    #    B2*C2 = 8000 (not a multiple of 128) -> 63 rows; row_tile=24 -> 3 tiles over 2 cores.
    B2, C2 = 16, 500
    stu2 = jax.random.normal(k3, (B2, C2), dtype=jnp.float32)
    tea2 = jax.random.normal(k4, (B2, C2), dtype=jnp.float32)
    out2 = jax.block_until_ready(
        kd_loss(stu2, tea2, row_tile=24, min_rows_for_pallas=0))
    ref2 = _kd_loss_jnp(stu2, tea2, 1e-6)
    assert jnp.allclose(out2, ref2, rtol=1e-5, atol=1e-5), (out2, ref2)

    # 3) Default path for tiny inputs goes through the fused-XLA fallback.
    out3 = jax.block_until_ready(kd_loss(stu, tea))
    assert jnp.allclose(out3, ref, rtol=1e-6, atol=1e-6), (out3, ref)

    print("KERNEL_OK")
</pallas_src>

<mosaic_0001>
module attributes {stable_mosaic.version = 11 : i64} {
  func.func @_kd_loss_kernel(%arg0: i32, %arg1: i32, %arg2: memref<8x128xf32, #tpu.memory_space<vmem>>, %arg3: memref<8x128xf32, #tpu.memory_space<vmem>>, %arg4: memref<1x8x128xf32, #tpu.memory_space<vmem>>) attributes {dimension_semantics = [#tpu.dimension_semantics<parallel>, #tpu.dimension_semantics<arbitrary>], iteration_bounds = array<i64: 1, 1>, scalar_prefetch = 0 : i64, scratch_operands = 0 : i64, tpu.core_type = #tpu.core_type<tc>, window_params = [{transform_indices = @transform_0, window_bounds = array<i64: 8, 128>}, {transform_indices = @transform_1, window_bounds = array<i64: 8, 128>}, {transform_indices = @transform_2, window_bounds = array<i64: 1, 8, 128>}]} {
    %c0_i32 = arith.constant 0 : i32
    %0 = arith.cmpi eq, %arg1, %c0_i32 : i32
    %1 = arith.extui %0 : i1 to i32
    %c0_i32_0 = arith.constant 0 : i32
    %2 = arith.cmpi ne, %1, %c0_i32_0 : i32
    scf.if %2 {
      %cst_19 = arith.constant 0.000000e+00 : f32
      %47 = vector.broadcast %cst_19 : f32 to vector<8x128xf32>
      %c0_20 = arith.constant 0 : index
      %c0_21 = arith.constant 0 : index
      %c0_22 = arith.constant 0 : index
      %48 = vector.load %arg4[%c0_20, %c0_21, %c0_22] : memref<1x8x128xf32, #tpu.memory_space<vmem>>, vector<1x8x128xf32>
      %49 = vector.shape_cast %48 : vector<1x8x128xf32> to vector<8x128xf32>
      %50 = vector.shape_cast %47 : vector<8x128xf32> to vector<1x8x128xf32>
      tpu.vector_store %arg4[%c0_20, %c0_21, %c0_22], %50 {strides = array<i32>} : memref<1x8x128xf32, #tpu.memory_space<vmem>>, vector<1x8x128xf32>,
    } else {
    }
    %c0 = arith.constant 0 : index
    %c0_1 = arith.constant 0 : index
    %3 = vector.load %arg2[%c0, %c0_1] : memref<8x128xf32, #tpu.memory_space<vmem>>, vector<8x128xf32>
    %c0_2 = arith.constant 0 : index
    %c0_3 = arith.constant 0 : index
    %4 = vector.load %arg3[%c0_2, %c0_3] : memref<8x128xf32, #tpu.memory_space<vmem>>, vector<8x128xf32>
    %cst = arith.constant 5.000000e-01 : f32
    %5 = vector.broadcast %cst : f32 to vector<8x128xf32>
    %6 = arith.mulf %5, %3 : vector<8x128xf32>
    %7 = math.tanh %6 : vector<8x128xf32>
    %cst_4 = arith.constant 1.000000e+00 : f32
    %8 = vector.broadcast %cst_4 : f32 to vector<8x128xf32>
    %9 = arith.addf %7, %8 : vector<8x128xf32>
    %cst_5 = arith.constant 5.000000e-01 : f32
    %10 = vector.broadcast %cst_5 : f32 to vector<8x128xf32>
    %11 = arith.mulf %10, %9 : vector<8x128xf32>
    %cst_6 = arith.constant 5.000000e-01 : f32
    %12 = vector.broadcast %cst_6 : f32 to vector<8x128xf32>
    %13 = arith.mulf %12, %4 : vector<8x128xf32>
    %14 = math.tanh %13 : vector<8x128xf32>
    %cst_7 = arith.constant 1.000000e+00 : f32
    %15 = vector.broadcast %cst_7 : f32 to vector<8x128xf32>
    %16 = arith.addf %14, %15 : vector<8x128xf32>
    %cst_8 = arith.constant 5.000000e-01 : f32
    %17 = vector.broadcast %cst_8 : f32 to vector<8x128xf32>
    %18 = arith.mulf %17, %16 : vector<8x128xf32>
    %cst_9 = arith.constant 0.000000e+00 : f32
    %19 = vector.broadcast %cst_9 : f32 to vector<8x128xf32>
    %20 = arith.subf %19, %18 : vector<8x128xf32>
    %cst_10 = arith.constant 9.99999997E-7 : f32
    %21 = vector.broadcast %cst_10 : f32 to vector<8x128xf32>
    %22 = arith.addf %11, %21 : vector<8x128xf32>
    %23 = math.log %22 : vector<8x128xf32>
    %24 = arith.mulf %20, %23 : vector<8x128xf32>
    %c1_i32 = arith.constant 1 : i32
    %25 = arith.muli %arg0, %c1_i32 : i32
    %26 = arith.addi %25, %arg1 : i32
    %c8_i32 = arith.constant 8 : i32
    %27 = arith.muli %26, %c8_i32 : i32
    %28 = tpu.iota {dimensions = array<i32: 0>} : vector<8x128xi32>
    %29 = tpu.iota {dimensions = array<i32: 1>} : vector<8x128xi32>
    %30 = vector.broadcast %27 : i32 to vector<8x128xi32>
    %31 = arith.addi %30, %28 : vector<8x128xi32>
    %c128_i32 = arith.constant 128 : i32
    %32 = vector.broadcast %c128_i32 : i32 to vector<8x128xi32>
    %33 = arith.muli %31, %32 : vector<8x128xi32>
    %34 = arith.addi %33, %29 : vector<8x128xi32>
    %c256_i32 = arith.constant 256 : i32
    %35 = vector.broadcast %c256_i32 : i32 to vector<8x128xi32>
    %36 = arith.cmpi slt, %34, %35 : vector<8x128xi32>
    %cst_11 = arith.constant 0.000000e+00 : f32
    %37 = vector.broadcast %cst_11 : f32 to vector<8x128xf32>
    %38 = arith.select %36, %24, %37 : vector<8x128xi1>, vector<8x128xf32>
    %c0_12 = arith.constant 0 : index
    %c0_13 = arith.constant 0 : index
    %c0_14 = arith.constant 0 : index
    %39 = vector.load %arg4[%c0_12, %c0_13, %c0_14] : memref<1x8x128xf32, #tpu.memory_space<vmem>>, vector<1x8x128xf32>
    %40 = vector.shape_cast %39 : vector<1x8x128xf32> to vector<8x128xf32>
    %41 = vector.shape_cast %38 : vector<8x128xf32> to vector<1x8x128xf32>
    %cst_15 = arith.constant dense<0.000000e+00> : vector<8x128xf32>
    %42 = vector.multi_reduction <add>, %41, %cst_15 [0] : vector<1x8x128xf32> to vector<8x128xf32>
    %43 = arith.addf %40, %42 : vector<8x128xf32>
    %c0_16 = arith.constant 0 : index
    %c0_17 = arith.constant 0 : index
    %c0_18 = arith.constant 0 : index
    %44 = vector.load %arg4[%c0_16, %c0_17, %c0_18] : memref<1x8x128xf32, #tpu.memory_space<vmem>>, vector<1x8x128xf32>
    %45 = vector.shape_cast %44 : vector<1x8x128xf32> to vector<8x128xf32>
    %46 = vector.shape_cast %43 : vector<8x128xf32> to vector<1x8x128xf32>
    tpu.vector_store %arg4[%c0_16, %c0_17, %c0_18], %46 {strides = array<i32>} : memref<1x8x128xf32, #tpu.memory_space<vmem>>, vector<1x8x128xf32>,
    return
  }
  func.func @transform_0(%arg0: i32, %arg1: i32) -> (i32, i32) {
    %c1_i32 = arith.constant 1 : i32
    %0 = arith.muli %arg0, %c1_i32 : i32
    %1 = arith.addi %0, %arg1 : i32
    %c0_i32 = arith.constant 0 : i32
    %2 = arith.minsi %1, %c0_i32 : i32
    %c0_i32_0 = arith.constant 0 : i32
    %c0_i32_1 = arith.constant 0 : i32
    return %2, %c0_i32_0 : i32, i32
  }
  func.func @transform_1(%arg0: i32, %arg1: i32) -> (i32, i32) {
    %c1_i32 = arith.constant 1 : i32
    %0 = arith.muli %arg0, %c1_i32 : i32
    %1 = arith.addi %0, %arg1 : i32
    %c0_i32 = arith.constant 0 : i32
    %2 = arith.minsi %1, %c0_i32 : i32
    %c0_i32_0 = arith.constant 0 : i32
    %c0_i32_1 = arith.constant 0 : i32
    return %2, %c0_i32_0 : i32, i32
  }
  func.func @transform_2(%arg0: i32, %arg1: i32) -> (i32, i32, i32) {
    %c0_i32 = arith.constant 0 : i32
    %c0_i32_0 = arith.constant 0 : i32
    %c0_i32_1 = arith.constant 0 : i32
    return %arg0, %c0_i32, %c0_i32_0 : i32, i32, i32
  }
}

</mosaic_0001>

<llo_original>
// kernel: tpu_custom_call.1
$region0: #{tpu_custom_call.1}
  #allocation0 [shape = 'u32[]', space=smem, size = 0x4, offset = 0x4, fixed_abs, tag = 'smem constant byte address 0x4 - core index']
  #allocation1 [shape = 'u32[72,128]{1,0:T(1,128)}', space=vmem, size = 0x9000, scoped, tag = 'internal scratch']
  %s0 = inlined_call_operand.hbm [shape: f32[2,128], index: 0, kind: input, shape index: {}]
  %s1 = inlined_call_operand.hbm [shape: f32[2,128], index: 1, kind: input, shape index: {}]
  %s2 = inlined_call_operand.hbm [shape: f32[1,8,128], index: 2, kind: output, shape index: {}]
  %s3 = sld [smem:[#allocation0]]
  $region30: #{tpu_custom_call.1} parent=0
    _
  %s5 = ssub.s32 1, %s3
  %s6 = scalar_select 0, %s5, %s3
  $region1: #{tpu_custom_call.1} parent=0
    #allocation2 [shape = 'u8[4096]{0}', space=vmem, size = 0x1000, scoped, tag = 'input window, operand 0, single buffered']
    #allocation3 [shape = 's32[1]{0}', space=sflag, size = 0x4, scoped, tag = 'scoped memory for tpu_custom_call.1']
    #allocation4 [shape = 's32[1]{0}', space=sflag, size = 0x4, scoped, tag = 'scoped memory for tpu_custom_call.1']
    #allocation5 [shape = 'u8[4096]{0}', space=vmem, size = 0x1000, scoped, tag = 'input window, operand 1, single buffered']
    #allocation6 [shape = 's32[1]{0}', space=sflag, size = 0x4, scoped, tag = 'scoped memory for tpu_custom_call.1']
    #allocation7 [shape = 'u8[4096]{0}', space=vmem, size = 0x1000, scoped, tag = 'output window, operand 0, single buffered']
    %7 = vsyncpa [#allocation3], 0
    %8 = vsyncpa [#allocation6], 0
    %9 = vsyncpa [#allocation4], 0
    // Predicated region
    $region2: #{tpu_custom_call.1} parent=1 // pred_check
      _
    $region3: #{tpu_custom_call.1} parent=1 // pred_check_branch
      %11 = sbr.rel (0) target = $region5
    $region4: #{tpu_custom_call.1} parent=1 // pred_region
      %s12 = sadd.s32 0, 0
      %p13 = scmp.lt.s32.totalorder %s12, 0
      %s14 = scalar_select %p13, %s12, 0
      %s15 = smul.u32 4, %s14
      %s16 = ssub.s32 1, %s15
      %s17 = smul.u32 2, %s16
      %s18 = ssub.s32 8, %s17
      %s19 = sshll.u32 %s18, 4
      %20 = vsyncadd [#allocation3], %s19
      %p21 = scmp.ne.s32.totalorder 0, %s17
      %s22 = smul.addr %s15, 2
      %s23 = scalar_lea.hbm %s0, %s22
      %s24 = smul.u32 2, %s16
      %s25 = sshll.u32 %s23, 4
      %s26 = int_to_ptr.hbm [resolvable:$true] %s25
      %s27 = sshll.u32 [#allocation2], 4
      %s28 = int_to_ptr.vmem [resolvable:$true] %s27
      %s29 = sshll.u32 %s24, 4
      %33 = dma.hbm_to_vmem [thread:$0]  (%p21), %s26, %s29, %s28, [#allocation3], 32, 32, 2
    $region5: #{tpu_custom_call.1} parent=1 // pred_fallthru
      _
    // Predicated region
    $region6: #{tpu_custom_call.1} parent=1 // pred_check
      _
    $region7: #{tpu_custom_call.1} parent=1 // pred_check_branch
      %35 = sbr.rel (0) target = $region9
    $region8: #{tpu_custom_call.1} parent=1 // pred_region
      %s36 = sadd.s32 0, 0
      %p37 = scmp.lt.s32.totalorder %s36, 0
      %s38 = scalar_select %p37, %s36, 0
      %s39 = smul.u32 4, %s38
      %s40 = ssub.s32 1, %s39
      %s41 = smul.u32 2, %s40
      %s42 = ssub.s32 8, %s41
      %s43 = sshll.u32 %s42, 4
      %44 = vsyncadd [#allocation6], %s43
      %p45 = scmp.ne.s32.totalorder 0, %s41
      %s46 = smul.addr %s39, 2
      %s47 = scalar_lea.hbm %s1, %s46
      %s48 = smul.u32 2, %s40
      %s49 = sshll.u32 %s47, 4
      %s50 = int_to_ptr.hbm [resolvable:$true] %s49
      %s51 = sshll.u32 [#allocation5], 4
      %s52 = int_to_ptr.vmem [resolvable:$true] %s51
      %s53 = sshll.u32 %s48, 4
      %57 = dma.hbm_to_vmem [thread:$0]  (%p45), %s50, %s53, %s52, [#allocation6], 32, 32, 2
    $region9: #{tpu_custom_call.1} parent=1 // pred_fallthru
      _
    // Predicated region
    $region10: #{tpu_custom_call.1} parent=1 // pred_check
      _
    $region11: #{tpu_custom_call.1} parent=1 // pred_check_branch
      %59 = sbr.rel (0) target = $region13
    $region12: #{tpu_custom_call.1} parent=1 // pred_region
      %61 = dma.done [#allocation3], 128
    $region13: #{tpu_custom_call.1} parent=1 // pred_fallthru
      _
    // Predicated region
    $region14: #{tpu_custom_call.1} parent=1 // pred_check
      _
    $region15: #{tpu_custom_call.1} parent=1 // pred_check_branch
      %63 = sbr.rel (0) target = $region17
    $region16: #{tpu_custom_call.1} parent=1 // pred_region
      %65 = dma.done [#allocation6], 128
    $region17: #{tpu_custom_call.1} parent=1 // pred_fallthru
      _
    %s66 = sadd.s32 0, 0
    %p67 = scmp.lt.s32.totalorder %s66, 0
    %s68 = scalar_select %p67, %s66, 0
    %s69 = smul.u32 4, %s68
    %s70 = ssub.s32 1, %s69
    %s71 = smul.u32 2, %s70
    %s72 = sadd.s32 0, 0
    %p73 = scmp.lt.s32.totalorder %s72, 0
    %s74 = scalar_select %p73, %s72, 0
    %s75 = smul.u32 4, %s74
    %s76 = ssub.s32 1, %s75
    %s77 = smul.u32 2, %s76
    %p78 = scmp.eq.s32.totalorder 0, 0
    // Predicated region
    $region18: #{tpu_custom_call.1} parent=1 // pred_check
      %p79 = pneg %p78
    $region19: #{tpu_custom_call.1} parent=1 // pred_check_branch
      %81 = sbr.rel (%p79) target = $region21
    $region20: #{tpu_custom_call.1} parent=1 // pred_region
      %82 = vst [vmem:[#allocation7] sm:$0xff] 0.0
    $region21: #{tpu_custom_call.1} parent=1 // pred_fallthru
      _
    %v83 = vld [vmem:[#allocation2] sm:$0xff]
    %v84 = vld [vmem:[#allocation5] sm:$0xff]
    %v85 = vmul.f32 %v83, 0.5
    %v86 = vtanh.pop %v85
    %v87 = vadd.f32 %v86, 1.0
    %v88 = vmul.f32 %v87, 0.5
    %v89 = vmul.f32 %v84, 0.5
    %v90 = vtanh.pop %v89
    %v91 = vadd.f32 %v90, 1.0
    %v92 = vmul.f32 %v91, 0.5
    %v93 = vsub.f32 0.0, %v92
    %v94 = vadd.f32 %v88, 1e-06
    %v95 = vlog2.pop %v94
    %v96 = vmul.f32 %v95, 0.6931472
    %v97 = vmul.f32 %v93, %v96
    %s98 = sadd.s32 0, 0
    %s99 = smul.u32 %s98, 8
    %v100 = vlaneseq
    %v101 = vshrl.u32 %v100, 7
    %v102 = vlaneseq
    %v103 = vand.u32 %v102, 127
    %v104 = vstv %s99
    %v105 = vadd.s32 %v104, %v101
    %v106 = vmul.u32 %v105, 128
    %v107 = vadd.s32 %v106, %v103
    %vm108 = vcmp.lt.s32.totalorder %v107, 256
    %v109 = vsel %vm108, %v97, 0.0
    %v110 = vld [vmem:[#allocation7] sm:$0xff]
    %v111 = vadd.f32 %v109, 0.0
    %v112 = vadd.f32 %v110, %v111
    %113 = vst [vmem:[#allocation7] sm:$0xff] %v112
    // Predicated region
    $region22: #{tpu_custom_call.1} parent=1 // pred_check
      _
    $region23: #{tpu_custom_call.1} parent=1 // pred_check_branch
      %115 = sbr.rel (0) target = $region25
    $region24: #{tpu_custom_call.1} parent=1 // pred_region
      %117 = vsyncadd [#allocation4], 0
      %s119 = sshll.u32 [#allocation7], 4
      %s120 = int_to_ptr.vmem [resolvable:$true] %s119
      %s121 = sshll.u32 %s2, 4
      %s122 = int_to_ptr.hbm [resolvable:$true] %s121
      %124 = dma.vmem_to_hbm [thread:$0]  %s120, 128, %s122, [#allocation4]
    $region25: #{tpu_custom_call.1} parent=1 // pred_fallthru
      _
    // Predicated region
    $region26: #{tpu_custom_call.1} parent=1 // pred_check
      _
    $region27: #{tpu_custom_call.1} parent=1 // pred_check_branch
      %126 = sbr.rel (0) target = $region29
    $region28: #{tpu_custom_call.1} parent=1 // pred_region
      %128 = dma.done [#allocation4], 128
    $region29: #{tpu_custom_call.1} parent=1 // pred_fallthru
      _
    %129 = vsyncpa [#allocation3], 1
    %130 = vsyncpa [#allocation6], 1
    %131 = vsyncpa [#allocation4], 1

</llo_original>
